<compile_context>
chip_gen: v5e
topology: v5e:2x2
jax: 0.10.0
libtpu: 0.0.40
codegen_flags: <defaults>
</compile_context>

<pallas_src>
import functools

import numpy as np
import jax
import jax.numpy as jnp
from jax.experimental import pallas as pl
from jax.experimental.pallas import tpu as pltpu


# ----------------------------- Pallas kernels ------------------------------ #

def _conv_rows_kernel(x_ref, wt_ref, b_ref, o_ref, *, H):
    # x_ref : [H+2, (W+2)*Cin]  zero-padded image, (W, Cin) flattened into lanes
    # wt_ref: [3, (W+2)*Cin, W*Cout]  block-Toeplitz weights (one slab per dy)
    # b_ref : [1, W*Cout]       bias tiled over output columns
    # o_ref : [H, W*Cout]       conv + ReLU output (lane-dense)
    wt = wt_ref[...]
    acc = None
    for dy in range(3):
        t = jnp.dot(x_ref[pl.ds(dy, H), :], wt[dy],
                    preferred_element_type=jnp.float32)
        acc = t if acc is None else acc + t
    o_ref[...] = jnp.maximum(acc + b_ref[...], 0.0)


def _pair_loss_kernel(fi_ref, ft_ref, o_ref, *, inv_chw):
    # fi_ref/ft_ref: [H*W, C] features of one (input, target) image pair.
    # o_ref: [1, 2] -> (sum |f_in - f_tgt| , sum |G_in - G_tgt|) partial sums.
    fi = fi_ref[...]
    ft = ft_ref[...]
    o_ref[0, 0] = jnp.sum(jnp.abs(fi - ft))
    gi = jnp.dot(fi.T, fi, preferred_element_type=jnp.float32)   # [C, C]
    gt = jnp.dot(ft.T, ft, preferred_element_type=jnp.float32)   # [C, C]
    o_ref[0, 1] = jnp.sum(jnp.abs(gi - gt)) * inv_chw


def _l1_mean_kernel(a_ref, b_ref, o_ref, acc_ref, *, inv_count):
    # Grid-tiled mean-|a-b| reduction; acc_ref is a resident (1,1) VMEM scalar.
    @pl.when(pl.program_id(0) == 0)
    def _():
        acc_ref[...] = jnp.zeros_like(acc_ref)

    acc_ref[...] += jnp.sum(jnp.abs(a_ref[...] - b_ref[...]))

    @pl.when(pl.program_id(0) == pl.num_programs(0) - 1)
    def _():
        o_ref[...] = acc_ref[...] * inv_count


# ------------------------------ thin wrappers ------------------------------ #

def _toeplitz_weight(w, width):
    """w: [Cout, Cin, 3, 3] -> [3, (width+2)*Cin, width*Cout] block-Toeplitz."""
    w_np = np.asarray(w, dtype=np.float32)
    cout, cin = w_np.shape[0], w_np.shape[1]
    wt = np.zeros((3, (width + 2) * cin, width * cout), np.float32)
    for dy in range(3):
        for dx in range(3):
            blk = w_np[:, :, dy, dx].T                      # [Cin, Cout]
            for xx in range(width):
                r0 = (xx + dx) * cin
                c0 = xx * cout
                wt[dy, r0:r0 + cin, c0:c0 + cout] = blk
    return jnp.asarray(wt)


def conv3x3_relu(x, w, b):
    """x: [B, H, W, Cin] (NHWC), w: [Cout, Cin, 3, 3], b: [Cout] -> [B, H, W, Cout]."""
    bsz, h, wd, cin = x.shape
    cout = w.shape[0]
    k = (wd + 2) * cin
    n_out = wd * cout
    xp = jnp.pad(x.astype(jnp.float32), ((0, 0), (1, 1), (1, 1), (0, 0)))
    xp = xp.reshape(bsz, h + 2, k)                          # lane dim = (W+2)*Cin
    wt = _toeplitz_weight(w, wd)                            # [3, K, W*Cout]
    brow = jnp.tile(jnp.asarray(b, jnp.float32), wd).reshape(1, n_out)

    out = pl.pallas_call(
        functools.partial(_conv_rows_kernel, H=h),
        grid=(bsz,),
        out_shape=jax.ShapeDtypeStruct((bsz, h, n_out), jnp.float32),
        in_specs=[
            pl.BlockSpec((None, h + 2, k), lambda n: (n, 0, 0)),
            pl.BlockSpec((3, k, n_out), lambda n: (0, 0, 0)),
            pl.BlockSpec((1, n_out), lambda n: (0, 0)),
        ],
        out_specs=pl.BlockSpec((None, h, n_out), lambda n: (n, 0, 0)),
        compiler_params=pltpu.CompilerParams(
            dimension_semantics=("parallel",),
            vmem_limit_bytes=32 * 1024 * 1024),
    )(xp, wt, brow)
    return out.reshape(bsz, h, wd, cout)


def feature_and_gram_l1(feat, n_pairs):
    """feat: [2N, H, W, C] (first N = input features, last N = target features).
       Returns (mean |f_in - f_tgt| , mean |gram_in - gram_tgt|)."""
    b2, h, wd, c = feat.shape
    s = h * wd
    f = feat.reshape(b2, s, c)
    f_in, f_tgt = f[:n_pairs], f[n_pairs:]
    parts = pl.pallas_call(
        functools.partial(_pair_loss_kernel, inv_chw=1.0 / float(c * h * wd)),
        grid=(n_pairs,),
        out_shape=jax.ShapeDtypeStruct((n_pairs, 1, 2), jnp.float32),
        in_specs=[
            pl.BlockSpec((None, s, c), lambda n: (n, 0, 0)),
            pl.BlockSpec((None, s, c), lambda n: (n, 0, 0)),
        ],
        out_specs=pl.BlockSpec((None, 1, 2), lambda n: (n, 0, 0)),
        compiler_params=pltpu.CompilerParams(dimension_semantics=("parallel",)),
    )(f_in, f_tgt)
    feat_l1 = jnp.sum(parts[:, 0, 0]) / float(n_pairs * c * h * wd)
    gram_l1 = jnp.sum(parts[:, 0, 1]) / float(n_pairs * c * c)
    return feat_l1, gram_l1


def l1_loss(a, b):
    """base_loss = F.l1_loss (mean reduction) as a tiled, lane-dense Pallas reduction."""
    af = a.reshape(-1).astype(jnp.float32)
    bf = b.reshape(-1).astype(jnp.float32)
    count = af.shape[0]
    lanes = 128
    rows = pl.cdiv(count, lanes)
    tile_rows = min(256, ((rows + 7) // 8) * 8)
    rows_p = ((rows + tile_rows - 1) // tile_rows) * tile_rows
    pad = rows_p * lanes - count                   # zero pad: contributes 0 to sum
    af = jnp.pad(af, (0, pad)).reshape(rows_p, lanes)
    bf = jnp.pad(bf, (0, pad)).reshape(rows_p, lanes)

    out = pl.pallas_call(
        functools.partial(_l1_mean_kernel, inv_count=1.0 / float(count)),
        grid=(rows_p // tile_rows,),
        out_shape=jax.ShapeDtypeStruct((1, 1), jnp.float32),
        in_specs=[
            pl.BlockSpec((tile_rows, lanes), lambda i: (i, 0)),
            pl.BlockSpec((tile_rows, lanes), lambda i: (i, 0)),
        ],
        out_specs=pl.BlockSpec((1, 1), lambda i: (0, 0)),
        scratch_shapes=[pltpu.VMEM((1, 1), jnp.float32)],
        compiler_params=pltpu.CompilerParams(dimension_semantics=("arbitrary",)),
    )(af, bf)
    return out[0, 0]


def maxpool2(x):
    # NHWC 2x2 max-pool (cheap XLA glue between conv layers).
    b, h, w, c = x.shape
    return x.reshape(b, h // 2, 2, w // 2, 2, c).max(axis=(2, 4))


# ------------------------------- FeatureLoss ------------------------------- #

class FeatureLoss:
    """Mirrors PyTorch FeatureLoss.forward():
       pixel L1 + sum_i w_i * L1(feat_i) + sum_i w_i^2 * 5000 * L1(gram_i)."""

    def __init__(self, conv_params, layer_wgts):
        # conv_params: list of (w [Cout,Cin,3,3], b [Cout]) — synthetic stand-in
        # for the hooked layers of m_feat.
        self.params = conv_params
        self.wgts = layer_wgts
        n = len(layer_wgts)
        self.metric_names = (['pixel']
                             + [f'feat_{i}' for i in range(n)]
                             + [f'gram_{i}' for i in range(n)])

    def make_features(self, x_nhwc):
        feats = []
        h = x_nhwc
        for i, (w, b) in enumerate(self.params):
            h = conv3x3_relu(h, w, b)          # hooked ReLU output, [2N,H,W,Cout]
            feats.append(h)
            if i < len(self.params) - 1:
                h = maxpool2(h)
        return feats

    def __call__(self, input, target):
        # input/target: NCHW float32, as in the PyTorch module.
        n = input.shape[0]
        xb = jnp.concatenate([input, target], axis=0)      # [2N, C, H, W]
        xb = jnp.transpose(xb, (0, 2, 3, 1))               # NHWC once at boundary
        feats = self.make_features(xb)                     # one pass over 2N images

        pixel = l1_loss(input, target)
        feat_losses, gram_losses = [], []
        for f, w in zip(feats, self.wgts):
            fl, gl = feature_and_gram_l1(f, n)
            feat_losses.append(fl * w)
            gram_losses.append(gl * (w ** 2) * 5000.0)

        self.feat_losses = [pixel] + feat_losses + gram_losses
        self.metrics = dict(zip(self.metric_names, self.feat_losses))
        return sum(self.feat_losses)


# ---------------------------------- main ----------------------------------- #

if __name__ == "__main__":
    key = jax.random.PRNGKey(0)
    k_in, k_tgt, kw1, kw2, kw3 = jax.random.split(key, 5)

    def init_conv(k, cout, cin):
        kw, kb = jax.random.split(k)
        w = jax.random.normal(kw, (cout, cin, 3, 3), jnp.float32) * 0.1
        b = jax.random.normal(kb, (cout,), jnp.float32) * 0.01
        return w, b

    # Synthetic 3-hook feature extractor: 3->8 (16x16), 8->16 (8x8), 16->32 (4x4)
    params = [init_conv(kw1, 8, 3), init_conv(kw2, 16, 8), init_conv(kw3, 32, 16)]

    x = jax.random.normal(k_in, (2, 3, 16, 16), jnp.float32)   # input  (NCHW)
    y = jax.random.normal(k_tgt, (2, 3, 16, 16), jnp.float32)  # target (NCHW)

    loss_fn = FeatureLoss(params, layer_wgts=[20.0, 70.0, 10.0])
    total = jax.block_until_ready(loss_fn(x, y))
    assert jnp.isfinite(total), "loss is not finite"
    print("KERNEL_OK")
</pallas_src>

<mosaic_0001>
module attributes {stable_mosaic.version = 11 : i64} {
  func.func @_conv_rows_kernel(%arg0: i32, %arg1: memref<1x18x54xf32, #tpu.memory_space<vmem>>, %arg2: memref<3x54x128xf32, #tpu.memory_space<vmem>>, %arg3: memref<1x128xf32, #tpu.memory_space<vmem>>, %arg4: memref<1x16x128xf32, #tpu.memory_space<vmem>>) attributes {dimension_semantics = [#tpu.dimension_semantics<parallel>], iteration_bounds = array<i64: 4>, scalar_prefetch = 0 : i64, scratch_operands = 0 : i64, tpu.core_type = #tpu.core_type<tc>, window_params = [{transform_indices = @transform_0, window_bounds = array<i64: 1, 18, 54>}, {pipeline_mode = #tpu.pipeline_mode<synchronous>, transform_indices = @transform_1, window_bounds = array<i64: 3, 54, 128>}, {pipeline_mode = #tpu.pipeline_mode<synchronous>, transform_indices = @transform_2, window_bounds = array<i64: 1, 128>}, {transform_indices = @transform_3, window_bounds = array<i64: 1, 16, 128>}]} {
    %c0 = arith.constant 0 : index
    %c0_0 = arith.constant 0 : index
    %c0_1 = arith.constant 0 : index
    %0 = vector.load %arg2[%c0, %c0_0, %c0_1] : memref<3x54x128xf32, #tpu.memory_space<vmem>>, vector<3x54x128xf32>
    %c0_2 = arith.constant 0 : index
    %c0_3 = arith.constant 0 : index
    %c0_4 = arith.constant 0 : index
    %1 = vector.load %arg1[%c0_2, %c0_3, %c0_4] : memref<1x18x54xf32, #tpu.memory_space<vmem>>, vector<1x16x54xf32>
    %2 = vector.shape_cast %1 : vector<1x16x54xf32> to vector<16x54xf32>
    %3 = vector.extract_strided_slice %0 {offsets = [0, 0, 0], sizes = [1, 54, 128], strides = [1, 1, 1]} : vector<3x54x128xf32> to vector<1x54x128xf32>
    %4 = vector.shape_cast %3 : vector<1x54x128xf32> to vector<54x128xf32>
    %cst = arith.constant dense<0.000000e+00> : vector<16x128xf32>
    %5 = tpu.matmul %2, %4, %cst {dimension_numbers = #tpu.dot_dimension_numbers<[1], [0], [0], [1], [0, 0, 1, 1], [], []>} : vector<16x54xf32>, vector<54x128xf32>, vector<16x128xf32> -> vector<16x128xf32>
    %c0_5 = arith.constant 0 : index
    %c1 = arith.constant 1 : index
    %c0_6 = arith.constant 0 : index
    %6 = vector.load %arg1[%c0_5, %c1, %c0_6] : memref<1x18x54xf32, #tpu.memory_space<vmem>>, vector<1x16x54xf32>
    %7 = vector.shape_cast %6 : vector<1x16x54xf32> to vector<16x54xf32>
    %8 = vector.extract_strided_slice %0 {offsets = [1, 0, 0], sizes = [1, 54, 128], strides = [1, 1, 1]} : vector<3x54x128xf32> to vector<1x54x128xf32>
    %9 = vector.shape_cast %8 : vector<1x54x128xf32> to vector<54x128xf32>
    %cst_7 = arith.constant dense<0.000000e+00> : vector<16x128xf32>
    %10 = tpu.matmul %7, %9, %cst_7 {dimension_numbers = #tpu.dot_dimension_numbers<[1], [0], [0], [1], [0, 0, 1, 1], [], []>} : vector<16x54xf32>, vector<54x128xf32>, vector<16x128xf32> -> vector<16x128xf32>
    %11 = arith.addf %5, %10 : vector<16x128xf32>
    %c0_8 = arith.constant 0 : index
    %c2 = arith.constant 2 : index
    %c0_9 = arith.constant 0 : index
    %12 = vector.load %arg1[%c0_8, %c2, %c0_9] : memref<1x18x54xf32, #tpu.memory_space<vmem>>, vector<1x16x54xf32>
    %13 = vector.shape_cast %12 : vector<1x16x54xf32> to vector<16x54xf32>
    %14 = vector.extract_strided_slice %0 {offsets = [2, 0, 0], sizes = [1, 54, 128], strides = [1, 1, 1]} : vector<3x54x128xf32> to vector<1x54x128xf32>
    %15 = vector.shape_cast %14 : vector<1x54x128xf32> to vector<54x128xf32>
    %cst_10 = arith.constant dense<0.000000e+00> : vector<16x128xf32>
    %16 = tpu.matmul %13, %15, %cst_10 {dimension_numbers = #tpu.dot_dimension_numbers<[1], [0], [0], [1], [0, 0, 1, 1], [], []>} : vector<16x54xf32>, vector<54x128xf32>, vector<16x128xf32> -> vector<16x128xf32>
    %17 = arith.addf %11, %16 : vector<16x128xf32>
    %c0_11 = arith.constant 0 : index
    %c0_12 = arith.constant 0 : index
    %18 = vector.load %arg3[%c0_11, %c0_12] : memref<1x128xf32, #tpu.memory_space<vmem>>, vector<1x128xf32>
    %19 = vector.broadcast %18 : vector<1x128xf32> to vector<16x128xf32>
    %20 = arith.addf %17, %19 : vector<16x128xf32>
    %cst_13 = arith.constant 0.000000e+00 : f32
    %21 = vector.broadcast %cst_13 : f32 to vector<16x128xf32>
    %22 = arith.maximumf %20, %21 : vector<16x128xf32>
    %c0_14 = arith.constant 0 : index
    %c0_15 = arith.constant 0 : index
    %c0_16 = arith.constant 0 : index
    %23 = vector.load %arg4[%c0_14, %c0_15, %c0_16] : memref<1x16x128xf32, #tpu.memory_space<vmem>>, vector<1x16x128xf32>
    %24 = vector.shape_cast %23 : vector<1x16x128xf32> to vector<16x128xf32>
    %25 = vector.shape_cast %22 : vector<16x128xf32> to vector<1x16x128xf32>
    tpu.vector_store %arg4[%c0_14, %c0_15, %c0_16], %25 {strides = array<i32>} : memref<1x16x128xf32, #tpu.memory_space<vmem>>, vector<1x16x128xf32>,
    return
  }
  func.func @transform_0(%arg0: i32) -> (i32, i32, i32) {
    %c0_i32 = arith.constant 0 : i32
    %c0_i32_0 = arith.constant 0 : i32
    %c0_i32_1 = arith.constant 0 : i32
    return %arg0, %c0_i32, %c0_i32_0 : i32, i32, i32
  }
  func.func @transform_1(%arg0: i32) -> (i32, i32, i32) {
    %c0_i32 = arith.constant 0 : i32
    %c0_i32_0 = arith.constant 0 : i32
    %c0_i32_1 = arith.constant 0 : i32
    %c0_i32_2 = arith.constant 0 : i32
    return %c0_i32, %c0_i32_0, %c0_i32_1 : i32, i32, i32
  }
  func.func @transform_2(%arg0: i32) -> (i32, i32) {
    %c0_i32 = arith.constant 0 : i32
    %c0_i32_0 = arith.constant 0 : i32
    %c0_i32_1 = arith.constant 0 : i32
    return %c0_i32, %c0_i32_0 : i32, i32
  }
  func.func @transform_3(%arg0: i32) -> (i32, i32, i32) {
    %c0_i32 = arith.constant 0 : i32
    %c0_i32_0 = arith.constant 0 : i32
    %c0_i32_1 = arith.constant 0 : i32
    return %arg0, %c0_i32, %c0_i32_0 : i32, i32, i32
  }
}

</mosaic_0001>

<llo_original>
// kernel: tpu_custom_call.1
$region0: #{tpu_custom_call.1}
  #allocation0 [shape = 'u32[]', space=smem, size = 0x4, offset = 0x4, fixed_abs, tag = 'smem constant byte address 0x4 - core index']
  #allocation1 [shape = 'u32[72,128]{1,0:T(1,128)}', space=vmem, size = 0x9000, scoped, tag = 'internal scratch']
  %s0 = inlined_call_operand.vmem [shape: f32[4,18,54], index: 0, kind: input, shape index: {}]
  %s1 = inlined_call_operand.vmem [shape: f32[3,54,128], index: 1, kind: input, shape index: {}]
  %s2 = inlined_call_operand.vmem [shape: f32[1,128], index: 2, kind: input, shape index: {}]
  %s3 = inlined_call_operand.hbm [shape: f32[4,16,128], index: 3, kind: output, shape index: {}]
  %s4 = sld [smem:[#allocation0]]
  $region45: #{tpu_custom_call.1} parent=0
    _
  %s6 = ssub.s32 1, %s4
  %s7 = scalar_select 0, %s6, %s4
  $region1: #{tpu_custom_call.1} parent=0
    #allocation2 [shape = 'u8[16384]{0}', space=vmem, size = 0x4000, scoped, tag = 'output window, operand 0']
    #allocation3 [shape = 's32[2]{0}', space=sflag, size = 0x8, scoped, tag = 'scoped memory for tpu_custom_call.1']
    %8 = vsyncpa [#allocation3], 0
    %s9 = scalar_lea.sflag [#allocation3], 1
    %10 = vsyncpa %s9, 0
    loop: start=0, step=1, limit=6
    $region2: #{tpu_custom_call.1} parent=1 // loop_pre_header
      _
    $region3: #{tpu_custom_call.1} parent=1 // loop_header
      %s12 = sphi 0, %s16
      %p13 = scmp.ge.s32.totalorder %s12, 6
      %s22 = sphi 0, %s24
      %s25 = sphi 0, %s22
      %s26 = sphi 0, %s25
      %s42 = sphi 0, %s26
      %s46 = sphi 0, %s46
      %s48 = sphi 0, %s46
      %s49 = sphi 0, %s48
      %s63 = sphi 0, %s49
      %s67 = sphi 0, %s67
      %s69 = sphi 0, %s67
      %s70 = sphi 0, %s69
      %s84 = sphi 0, %s70
      %s90 = sphi 0, %s92
      %s93 = sphi 0, %s90
      %s94 = sphi 0, %s93
      %s110 = sphi 0, %s94
    $region4: #{tpu_custom_call.1} parent=1 // loop_header_branch
      %15 = sbr.rel (%p13) target = $region8
    $region5: #{tpu_custom_call.1} parent=1 // loop_body
      %s17 = ssub.s32 %s12, 1
      %s18 = ssub.s32 %s12, 2
      %s19 = sadd.s32 %s12, 1
      %s20 = ssub.s32 %s12, %s19
      %p21 = scmp.eq.s32.totalorder %s20, 0
      %s23 = sadd.s32 %s22, 1
      %s24 = scalar_select %p21, %s22, %s23
      %p27 = pneg %p21
      %p28 = scmp.eq.s32.totalorder %s12, 3
      %p29 = por %p27, %p28
      %p30 = scmp.ne.s32.totalorder %s22, %s25
      %p31 = scmp.eq.s32.totalorder %s12, 0
      %p32 = por %p30, %p31
      %p33 = scmp.ne.s32.totalorder %s22, %s25
      %p34 = scmp.eq.s32.totalorder %s17, 3
      %p35 = por %p33, %p34
      %p36 = scmp.ne.s32.totalorder %s25, %s26
      %p37 = scmp.eq.s32.totalorder %s17, 0
      %p38 = por %p36, %p37
      %p39 = scmp.ne.s32.totalorder %s25, %s26
      %p40 = scmp.eq.s32.totalorder %s18, 3
      %p41 = por %p39, %p40
      %p43 = scmp.ne.s32.totalorder %s26, %s42
      %p44 = scmp.eq.s32.totalorder %s18, 0
      %p45 = por %p43, %p44
      %s47 = sadd.s32 %s46, 1
      %p50 = scmp.eq.s32.totalorder %s12, 3
      %p51 = scmp.ne.s32.totalorder %s46, %s48
      %p52 = scmp.eq.s32.totalorder %s12, 0
      %p53 = por %p51, %p52
      %p54 = scmp.ne.s32.totalorder %s46, %s48
      %p55 = scmp.eq.s32.totalorder %s17, 3
      %p56 = por %p54, %p55
      %p57 = scmp.ne.s32.totalorder %s48, %s49
      %p58 = scmp.eq.s32.totalorder %s17, 0
      %p59 = por %p57, %p58
      %p60 = scmp.ne.s32.totalorder %s48, %s49
      %p61 = scmp.eq.s32.totalorder %s18, 3
      %p62 = por %p60, %p61
      %p64 = scmp.ne.s32.totalorder %s49, %s63
      %p65 = scmp.eq.s32.totalorder %s18, 0
      %p66 = por %p64, %p65
      %s68 = sadd.s32 %s67, 1
      %p71 = scmp.eq.s32.totalorder %s12, 3
      %p72 = scmp.ne.s32.totalorder %s67, %s69
      %p73 = scmp.eq.s32.totalorder %s12, 0
      %p74 = por %p72, %p73
      %p75 = scmp.ne.s32.totalorder %s67, %s69
      %p76 = scmp.eq.s32.totalorder %s17, 3
      %p77 = por %p75, %p76
      %p78 = scmp.ne.s32.totalorder %s69, %s70
      %p79 = scmp.eq.s32.totalorder %s17, 0
      %p80 = por %p78, %p79
      %p81 = scmp.ne.s32.totalorder %s69, %s70
      %p82 = scmp.eq.s32.totalorder %s18, 3
      %p83 = por %p81, %p82
      %p85 = scmp.ne.s32.totalorder %s70, %s84
      %p86 = scmp.eq.s32.totalorder %s18, 0
      %p87 = por %p85, %p86
      %s88 = ssub.s32 %s12, %s19
      %p89 = scmp.eq.s32.totalorder %s88, 0
      %s91 = sadd.s32 %s90, 1
      %s92 = scalar_select %p89, %s90, %s91
      %p95 = pneg %p89
      %p96 = scmp.eq.s32.totalorder %s12, 3
      %p97 = por %p95, %p96
      %p98 = scmp.ne.s32.totalorder %s90, %s93
      %p99 = scmp.eq.s32.totalorder %s12, 0
      %p100 = por %p98, %p99
      %p101 = scmp.ne.s32.totalorder %s90, %s93
      %p102 = scmp.eq.s32.totalorder %s17, 3
      %p103 = por %p101, %p102
      %p104 = scmp.ne.s32.totalorder %s93, %s94
      %p105 = scmp.eq.s32.totalorder %s17, 0
      %p106 = por %p104, %p105
      %p107 = scmp.ne.s32.totalorder %s93, %s94
      %p108 = scmp.eq.s32.totalorder %s18, 3
      %p109 = por %p107, %p108
      %p111 = scmp.ne.s32.totalorder %s94, %s110
      %p112 = scmp.eq.s32.totalorder %s18, 0
      %p113 = por %p111, %p112
      %p114 = scmp.le.s32.totalorder 1, %s12
      %p115 = scmp.lt.s32.totalorder %s12, 5
      %p116 = pnand %p114, %p115
      %p117 = pneg %p116
      // Predicated region
      $region9: #{tpu_custom_call.1} parent=5 // pred_check
        _
      $region10: #{tpu_custom_call.1} parent=5 // pred_check_branch
        %119 = sbr.rel (%p116) target = $region12
      $region11: #{tpu_custom_call.1} parent=5 // pred_region
        %s120 = ssub.s32 %s12, 1
        // Predicated region
        $region13: #{tpu_custom_call.1} parent=11 // pred_check
          %p121 = pneg %p59
        $region14: #{tpu_custom_call.1} parent=11 // pred_check_branch
          %123 = sbr.rel (%p121) target = $region16
        $region15: #{tpu_custom_call.1} parent=11 // pred_region
          _
        $region16: #{tpu_custom_call.1} parent=11 // pred_fallthru
          _
        // Predicated region
        $region17: #{tpu_custom_call.1} parent=11 // pred_check
          %p124 = pneg %p80
        $region18: #{tpu_custom_call.1} parent=11 // pred_check_branch
          %126 = sbr.rel (%p124) target = $region20
        $region19: #{tpu_custom_call.1} parent=11 // pred_region
          _
        $region20: #{tpu_custom_call.1} parent=11 // pred_fallthru
          _
      $region12: #{tpu_custom_call.1} parent=5 // pred_fallthru
        _
      %p127 = scmp.lt.s32.totalorder %s12, 4
      // Predicated region
      $region21: #{tpu_custom_call.1} parent=5 // pred_check
        %p128 = pneg %p127
      $region22: #{tpu_custom_call.1} parent=5 // pred_check_branch
        %130 = sbr.rel (%p128) target = $region24
      $region23: #{tpu_custom_call.1} parent=5 // pred_region
        // Predicated region
        $region25: #{tpu_custom_call.1} parent=23 // pred_check
          %p131 = pneg %p32
        $region26: #{tpu_custom_call.1} parent=23 // pred_check_branch
          %133 = sbr.rel (%p131) target = $region28
        $region27: #{tpu_custom_call.1} parent=23 // pred_region
          %p134 = scmp.lt.s32.totalorder %s12, 3
          %s135 = scalar_select %p134, %s12, 3
          %s136 = smul.addr %s135, 3
          %s137 = smul.addr %s136, 8
          %s138 = scalar_lea.vmem %s0, %s137
        $region28: #{tpu_custom_call.1} parent=23 // pred_fallthru
          _
      $region24: #{tpu_custom_call.1} parent=5 // pred_fallthru
        _
      %p139 = scmp.le.s32.totalorder 1, %s12
      %p140 = scmp.lt.s32.totalorder %s12, 5
      %p141 = pnand %p139, %p140
      %p142 = pneg %p141
      // Predicated region
      $region29: #{tpu_custom_call.1} parent=5 // pred_check
        _
      $region30: #{tpu_custom_call.1} parent=5 // pred_check_branch
        %144 = sbr.rel (%p141) target = $region32
      $region31: #{tpu_custom_call.1} parent=5 // pred_region
        %s145 = ssub.s32 %s12, 1
        %p146 = scmp.lt.s32.totalorder %s17, 3
        %s147 = scalar_select %p146, %s17, 3
        %s148 = smul.addr %s147, 3
        %s149 = smul.addr %s148, 8
        %s150 = scalar_lea.vmem %s0, %s149
        %p151 = pneg %p38
        %p152 = pneg %p35
        %p153 = pneg %p59
        %p154 = pneg %p56
        %p155 = pneg %p80
        %p156 = pneg %p77
        %p157 = pneg %p106
        %p158 = pneg %p103
        %s159 = sand.u32 %s93, 1
        %s160 = scalar_lea.sflag [#allocation3], %s159
        %s161 = sand.u32 %s93, 1
        %s162 = smul.addr %s161, 16
        %s163 = scalar_lea.vmem [#allocation2], %s162
        %p164 = scmp.lt.s32.totalorder %s17, 3
        %s165 = scalar_select %p164, %s17, 3
        %s166 = smul.addr %s165, 3
        %s167 = smul.addr %s166, 8
        %s168 = scalar_lea.vmem %s0, %s167
        %v169 = vld [vmem:[%s1] sm:$0xff]
        %v170 = vld [vmem:[%s1 + $0x8] sm:$0xff]
        %v171 = vld [vmem:[%s1 + $0x10] sm:$0xff]
        %v172 = vld [vmem:[%s1 + $0x18] sm:$0xff]
        %v173 = vld [vmem:[%s1 + $0x20] sm:$0xff]
        %v174 = vld [vmem:[%s1 + $0x28] sm:$0xff]
        %v175 = vld [vmem:[%s1 + $0x30] sm:$0x3f]
        %v176 = vld [vmem:[%s1 + $0x38] sm:$0xff]
        %v177 = vld [vmem:[%s1 + $0x40] sm:$0xff]
        %v178 = vld [vmem:[%s1 + $0x48] sm:$0xff]
        %v179 = vld [vmem:[%s1 + $0x50] sm:$0xff]
        %v180 = vld [vmem:[%s1 + $0x58] sm:$0xff]
        %v181 = vld [vmem:[%s1 + $0x60] sm:$0xff]
        %v182 = vld [vmem:[%s1 + $0x68] sm:$0x3f]
        %v183 = vld [vmem:[%s1 + $0x70] sm:$0xff]
        %v184 = vld [vmem:[%s1 + $0x78] sm:$0xff]
        %v185 = vld [vmem:[%s1 + $0x80] sm:$0xff]
        %v186 = vld [vmem:[%s1 + $0x88] sm:$0xff]
        %v187 = vld [vmem:[%s1 + $0x90] sm:$0xff]
        %v188 = vld [vmem:[%s1 + $0x98] sm:$0xff]
        %v189 = vld [vmem:[%s1 + $0xa0] sm:$0x3f]
        %v190 = vld [vmem:[%s168] sm:$0xff]
        %v191 = vld [vmem:[%s168 + $0x8] sm:$0xff]
        %v192 = vld [vmem:[%s168 + $0x1] sm:$0xff]
        %v193 = vld [vmem:[%s168 + $0x9] sm:$0xff]
        %vm194 = vcmask 441344
        %v196 = vsel %vm194, %v192, 0
        %v199 = vsel %vm194, %v193, 0
        %vm201 = vcmask 1045504
        %v203 = vsel %vm201, %v182, 0
        %205 = vmatpush.msra.mxu0 0.0
        %206 = vmatpush.msra.mxu0 0.0
        %207 = vmatpush.msra.mxu0 0.0
        %208 = vmatpush.msra.mxu0 0.0
        %209 = vmatpush.msra.mxu0 0.0
        %210 = vmatpush.msra.mxu0 0.0
        %211 = vmatpush.msra.mxu0 0.0
        %212 = vmatpush.msra.mxu0 0.0
        %213 = vmatpush.msra.mxu0 0.0
        %214 = vmatpush.msra.mxu0 %v203
        %215 = vmatpush.msra.mxu0 %v181
        %216 = vmatpush.msra.mxu0 %v180
        %217 = vmatpush.msra.mxu0 %v179
        %218 = vmatpush.msra.mxu0 %v178
        %219 = vmatpush.msra.mxu0 %v177
        %220 = vmatpush.msra.mxu0 %v176
        %221 = vmatmul.f32.gmra.mxu0 %v196
        %v222 = vpop.f32.mrf.mxu0
        %v223 = vadd.f32 0.0, %v222
        %224 = vmatmul.f32.gmra.mxu0 %v199
        %v225 = vpop.f32.mrf.mxu0
        %v226 = vadd.f32 0.0, %v225
        %227 = vdwg.mxu0
        %v229 = vsel %vm194, %v190, 0
        %v232 = vsel %vm194, %v191, 0
        %v235 = vsel %vm201, %v175, 0
        %237 = vmatpush.msra.mxu0 0.0
        %238 = vmatpush.msra.mxu0 0.0
        %239 = vmatpush.msra.mxu0 0.0
        %240 = vmatpush.msra.mxu0 0.0
        %241 = vmatpush.msra.mxu0 0.0
        %242 = vmatpush.msra.mxu0 0.0
        %243 = vmatpush.msra.mxu0 0.0
        %244 = vmatpush.msra.mxu0 0.0
        %245 = vmatpush.msra.mxu0 0.0
        %246 = vmatpush.msra.mxu0 %v235
        %247 = vmatpush.msra.mxu0 %v174
        %248 = vmatpush.msra.mxu0 %v173
        %249 = vmatpush.msra.mxu0 %v172
        %250 = vmatpush.msra.mxu0 %v171
        %251 = vmatpush.msra.mxu0 %v170
        %252 = vmatpush.msra.mxu0 %v169
        %253 = vmatmul.f32.gmra.mxu0 %v229
        %v254 = vpop.f32.mrf.mxu0
        %v255 = vadd.f32 %v223, %v254
        %256 = vmatmul.f32.gmra.mxu0 %v232
        %v257 = vpop.f32.mrf.mxu0
        %v258 = vadd.f32 %v226, %v257
        %259 = vdwg.mxu0
        %v260 = vld [vmem:[%s168 + $0x2] sm:$0xff]
        %v261 = vld [vmem:[%s168 + $0xa] sm:$0xff]
        %v263 = vsel %vm194, %v260, 0
        %v266 = vsel %vm194, %v261, 0
        %v269 = vsel %vm201, %v189, 0
        %271 = vmatpush.msra.mxu0 0.0
        %272 = vmatpush.msra.mxu0 0.0
        %273 = vmatpush.msra.mxu0 0.0
        %274 = vmatpush.msra.mxu0 0.0
        %275 = vmatpush.msra.mxu0 0.0
        %276 = vmatpush.msra.mxu0 0.0
        %277 = vmatpush.msra.mxu0 0.0
        %278 = vmatpush.msra.mxu0 0.0
        %279 = vmatpush.msra.mxu0 0.0
        %280 = vmatpush.msra.mxu0 %v269
        %281 = vmatpush.msra.mxu0 %v188
        %282 = vmatpush.msra.mxu0 %v187
        %283 = vmatpush.msra.mxu0 %v186
        %284 = vmatpush.msra.mxu0 %v185
        %285 = vmatpush.msra.mxu0 %v184
        %286 = vmatpush.msra.mxu0 %v183
        %287 = vmatmul.f32.gmra.mxu0 %v263
        %v288 = vpop.f32.mrf.mxu0
        %v289 = vadd.f32 0.0, %v288
        %290 = vmatmul.f32.gmra.mxu0 %v266
        %v291 = vpop.f32.mrf.mxu0
        %v292 = vadd.f32 0.0, %v291
        %293 = vdwg.mxu0
        %v294 = vadd.f32 %v255, %v289
        %v295 = vadd.f32 %v258, %v292
        %v296 = vld [vmem:[%s2] sm:$0x1]
        %v298 = vperm.slane %v296, 0
        %v300 = vadd.f32 %v294, %v298
        %v301 = vadd.f32 %v295, %v298
        %v302 = vmax.f32 %v300, 0.0
        %v303 = vmax.f32 %v301, 0.0
        %304 = vst [vmem:[%s163] sm:$0xff] %v302
        %305 = vst [vmem:[%s163 + $0x8] sm:$0xff] %v303
        %s306 = sand.u32 %s93, 1
        %s307 = scalar_lea.sflag [#allocation3], %s306
        %s308 = sand.u32 %s93, 1
        %s309 = smul.addr %s308, 16
        %s310 = scalar_lea.vmem [#allocation2], %s309
        // Predicated region
        $region33: #{tpu_custom_call.1} parent=31 // pred_check
          %p311 = pneg %p103
        $region34: #{tpu_custom_call.1} parent=31 // pred_check_branch
          %313 = sbr.rel (%p311) target = $region36
        $region35: #{tpu_custom_call.1} parent=31 // pred_region
          %315 = vsyncadd %s307, 0
          %s316 = smul.addr %s17, 2
          %s317 = smul.addr %s316, 8
          %s318 = scalar_lea.hbm %s3, %s317
          %s319 = sshll.u32 %s310, 4
          %s320 = int_to_ptr.vmem [resolvable:$true] %s319
          %s321 = sshll.u32 %s318, 4
          %s322 = int_to_ptr.hbm [resolvable:$true] %s321
          %327 = dma.vmem_to_hbm [thread:$0]  %s320, 256, %s322, %s307, 128, 128, 8
        $region36: #{tpu_custom_call.1} parent=31 // pred_fallthru
          _
      $region32: #{tpu_custom_call.1} parent=5 // pred_fallthru
        _
      %p328 = scmp.le.s32.totalorder 2, %s12
      // Predicated region
      $region37: #{tpu_custom_call.1} parent=5 // pred_check
        %p329 = pneg %p328
      $region38: #{tpu_custom_call.1} parent=5 // pred_check_branch
        %331 = sbr.rel (%p329) target = $region40
      $region39: #{tpu_custom_call.1} parent=5 // pred_region
        %s332 = ssub.s32 %s12, 2
        // Predicated region
        $region41: #{tpu_custom_call.1} parent=39 // pred_check
          %p333 = pneg %p109
        $region42: #{tpu_custom_call.1} parent=39 // pred_check_branch
          %335 = sbr.rel (%p333) target = $region44
        $region43: #{tpu_custom_call.1} parent=39 // pred_region
          %s336 = sand.u32 %s94, 1
          %s337 = scalar_lea.sflag [#allocation3], %s336
          %s338 = sand.u32 %s94, 1
          %s339 = smul.addr %s338, 16
          %s340 = scalar_lea.vmem [#allocation2], %s339
          %342 = dma.done %s337, 256
        $region44: #{tpu_custom_call.1} parent=39 // pred_fallthru
          _
      $region40: #{tpu_custom_call.1} parent=5 // pred_fallthru
        _
    $region6: #{tpu_custom_call.1} parent=1 // loop_footer
      %s16 = sadd.s32 1, %s12
    $region7: #{tpu_custom_call.1} parent=1 // loop_footer_branch
      %11 = sbr.rel target = $region3
    $region8: #{tpu_custom_call.1} parent=1 // loop_exit
      _
    %343 = vsyncpa [#allocation3], 1
    %s344 = scalar_lea.sflag [#allocation3], 1
    %345 = vsyncpa %s344, 1

</llo_original>
